<compile_context>
chip_gen: v5e
topology: v5e:2x2
jax: 0.10.0
libtpu: 0.0.40
codegen_flags: <defaults>
</compile_context>

<pallas_src>
import jax
import jax.numpy as jnp
from jax.experimental import pallas as pl
from jax.experimental.pallas import tpu as pltpu


def _round_up(n, m):
    return ((n + m - 1) // m) * m


def _cdiv(a, b):
    return -(-a // b)


def _erf_f32(z):
    """erf(z) via Abramowitz & Stegun 7.1.26 (max abs err ~1.5e-7, f32-exact).

    Uses only mul/add/exp/abs/where + pl.reciprocal so it always lowers on Mosaic.
    """
    a1 = 0.254829592
    a2 = -0.284496736
    a3 = 1.421413741
    a4 = -1.453152027
    a5 = 1.061405429
    p = 0.3275911
    az = jnp.abs(z)
    t = pl.reciprocal(1.0 + p * az, approx=False)
    poly = ((((a5 * t + a4) * t + a3) * t + a2) * t + a1) * t
    y = 1.0 - poly * jnp.exp(-az * az)
    return jnp.where(z < 0.0, -y, y)


def _gelu_exact(h):
    # nn.GELU(approximate='none'):  0.5 * h * (1 + erf(h / sqrt(2)))
    return 0.5 * h * (1.0 + _erf_f32(h * 0.7071067811865476))


# ----------------------------------------------------------------------------
# Kernels.  Grid = (row tiles, inner-dim tiles); the inner-dim axis is the
# reduction of the second matmul (last grid axis, "arbitrary").
# ----------------------------------------------------------------------------
def _ffn_kernel_acc(x_ref, w1_ref, b1_ref, w2_ref, b2_ref, o_ref, acc_ref):
    """Variant with a separate f32 accumulator (used when I/O dtype != f32)."""
    k = pl.program_id(1)

    @pl.when(k == 0)
    def _init():
        # Initialize the accumulator with b2 (saves a finalize add pass).
        acc_ref[...] = jnp.broadcast_to(
            b2_ref[...].astype(jnp.float32), acc_ref.shape
        )

    # First projection for this inner-dim tile: (bm, dim) @ (dim, bk) -> f32
    h = jnp.dot(x_ref[...], w1_ref[...], preferred_element_type=jnp.float32)
    h = h + b1_ref[...].astype(jnp.float32)
    h = _gelu_exact(h)

    # Partial second projection: (bm, bk) @ (bk, dim_out), accumulated in f32.
    acc_ref[...] += jnp.dot(
        h.astype(w2_ref.dtype), w2_ref[...], preferred_element_type=jnp.float32
    )

    @pl.when(k == pl.num_programs(1) - 1)
    def _finalize():
        o_ref[...] = acc_ref[...].astype(o_ref.dtype)


def _ffn_kernel_f32(x_ref, w1_ref, b1_ref, w2_ref, b2_ref, o_ref):
    """f32 I/O variant: accumulate directly into the resident output block."""
    k = pl.program_id(1)

    @pl.when(k == 0)
    def _init():
        o_ref[...] = jnp.broadcast_to(
            b2_ref[...].astype(jnp.float32), o_ref.shape
        )

    h = jnp.dot(x_ref[...], w1_ref[...], preferred_element_type=jnp.float32)
    h = h + b1_ref[...].astype(jnp.float32)
    h = _gelu_exact(h)
    o_ref[...] += jnp.dot(h, w2_ref[...], preferred_element_type=jnp.float32)


# ----------------------------------------------------------------------------
# Generation-aware config + VMEM-budget tile selection.
# ----------------------------------------------------------------------------
def _device_config():
    kind = ""
    try:
        kind = jax.devices()[0].device_kind.lower()
    except Exception:
        pass
    if "v7" in kind:
        # 64 MiB physical VMEM per TensorCore, 2 TCs per chip.
        return {"vmem_limit": 56 * 1024 * 1024, "min_row_tiles": 2}
    # v5e / v6e: 128 MiB physical VMEM, single TC (explicit limit is still
    # essential on v5e whose default scoped limit is only 16 MiB).
    return {"vmem_limit": 100 * 1024 * 1024, "min_row_tiles": 1}


def _choose_tiles(m, dim, inner, dim_out, in_bytes, out_bytes, sublane,
                  vmem_limit, min_row_tiles, separate_acc):
    budget = int(0.8 * vmem_limit)  # leave compiler headroom for spills etc.

    def fits(bm, bk):
        nbuf = 2  # pipeline double-buffering of every streamed block
        in_tiles = (bm * dim + dim * bk + bk + bk * dim_out + dim_out) * in_bytes
        out_tile = bm * dim_out * out_bytes
        acc = bm * dim_out * 4 if separate_acc else 0
        interm = int(1.5 * bm * bk * 4)  # f32 GELU intermediate (+ cast copy)
        return nbuf * (in_tiles + out_tile) + acc + interm <= budget

    # block_k candidates: full inner, or a 128-multiple divisor of it (descending).
    k_cands = [inner] + [c for c in (4096, 2048, 1024, 512, 256, 128)
                         if c < inner and inner % c == 0]

    # block_m candidates: as large as possible first (this is the main knob for
    # weight re-streaming / arithmetic intensity), capped at round_up(m, sublane).
    m_ceil = _round_up(m, sublane)
    m_cands = [min(m_ceil, 1024)]
    m_cands += [c for c in (768, 512, 384, 256, 128, 64, 32, 16, 8)
                if c < m_cands[0]]

    bm_sel, bk_sel = None, None
    for bm in m_cands:
        for bk in k_cands:
            if fits(bm, bk):
                bm_sel, bk_sel = bm, bk
                break
        if bm_sel is not None:
            break
    if bm_sel is None:  # nothing fits the budget model -> smallest legal tiles
        bm_sel, bk_sel = m_cands[-1], k_cands[-1]

    # Megacore (v7x): make sure the "parallel" row axis has >= 2 tiles.
    if min_row_tiles > 1 and m > sublane:
        if _cdiv(m, bm_sel) < min_row_tiles:
            bm_sel = max(sublane, _round_up(_cdiv(m, min_row_tiles), sublane))

    return bm_sel, bk_sel


# ----------------------------------------------------------------------------
# Wrapper.
# ----------------------------------------------------------------------------
def feedforward(x, w1, b1, w2, b2, *, block_m=None, block_k=None):
    """Fused FFN forward.  x: [..., dim]; w1: [dim, inner]; w2: [inner, dim_out]."""
    orig_shape = x.shape
    dim = orig_shape[-1]
    inner = w1.shape[1]
    dim_out = w2.shape[1]
    assert w1.shape == (dim, inner)
    assert w2.shape == (inner, dim_out)
    assert b1.shape[-1] == inner and b2.shape[-1] == dim_out

    # Flatten leading dims into one row axis (lane-dense, amortizes per-step cost).
    x2 = x.reshape(-1, dim)
    m = x2.shape[0]

    out_dtype = x.dtype
    use_acc_scratch = out_dtype != jnp.float32
    in_bytes = jnp.dtype(x.dtype).itemsize
    out_bytes = jnp.dtype(out_dtype).itemsize
    # Sublane packing: 8 rows for f32, 16 for bf16, 32 for int8/fp8.
    sublane = max(8, 32 // max(in_bytes, 1))

    cfg = _device_config()
    if block_m is None or block_k is None:
        bm, bk = _choose_tiles(m, dim, inner, dim_out, in_bytes, out_bytes,
                               sublane, cfg["vmem_limit"], cfg["min_row_tiles"],
                               use_acc_scratch)
        block_m = block_m or bm
        block_k = block_k or bk
    assert inner % block_k == 0, "block_k must divide the inner dimension"

    b1_2 = b1.reshape(1, inner)
    b2_2 = b2.reshape(1, dim_out)

    # No padding: partial boundary row tiles are clipped by the Pallas pipeline;
    # rows are independent through both matmuls so garbage tail rows are harmless.
    grid = (_cdiv(m, block_m), inner // block_k)

    kernel = _ffn_kernel_acc if use_acc_scratch else _ffn_kernel_f32
    scratch = ([pltpu.VMEM((block_m, dim_out), jnp.float32)]
               if use_acc_scratch else [])

    out = pl.pallas_call(
        kernel,
        out_shape=jax.ShapeDtypeStruct((m, dim_out), out_dtype),
        grid_spec=pltpu.PrefetchScalarGridSpec(
            num_scalar_prefetch=0,
            grid=grid,
            in_specs=[
                pl.BlockSpec((block_m, dim), lambda i, k: (i, 0)),      # x rows
                pl.BlockSpec((dim, block_k), lambda i, k: (0, k)),      # W1 cols
                pl.BlockSpec((1, block_k), lambda i, k: (0, k)),        # b1
                pl.BlockSpec((block_k, dim_out), lambda i, k: (k, 0)),  # W2 rows
                pl.BlockSpec((1, dim_out), lambda i, k: (0, 0)),        # b2
            ],
            out_specs=pl.BlockSpec((block_m, dim_out), lambda i, k: (i, 0)),
            scratch_shapes=scratch,
        ),
        compiler_params=pltpu.CompilerParams(
            # rows are independent -> megacore-parallel; inner dim is a reduction.
            dimension_semantics=("parallel", "arbitrary"),
            vmem_limit_bytes=cfg["vmem_limit"],
        ),
    )(x2, w1, b1_2, w2, b2_2)

    return out.reshape(*orig_shape[:-1], dim_out)


def feedforward_reference(x, w1, b1, w2, b2):
    """Pure-JAX reference matching the PyTorch FeedForward module."""
    xf = x.astype(jnp.float32)
    h = xf @ w1.astype(jnp.float32) + b1.astype(jnp.float32)
    h = jax.nn.gelu(h, approximate=False)        # GELU(approximate='none')
    out = h @ w2.astype(jnp.float32) + b2.astype(jnp.float32)
    return out.astype(x.dtype)


if __name__ == "__main__":
    key = jax.random.PRNGKey(0)
    k_x, k_w1, k_b1, k_w2, k_b2 = jax.random.split(key, 5)

    batch, seq, dim = 2, 8, 32
    mult = 4
    inner = dim * mult           # 128
    dim_out = dim                # dim_out defaults to dim in the module

    x = jax.random.normal(k_x, (batch, seq, dim), dtype=jnp.float32)

    # PyTorch nn.Linear default init: U(-1/sqrt(fan_in), 1/sqrt(fan_in)).
    lim1 = 1.0 / (dim ** 0.5)
    lim2 = 1.0 / (inner ** 0.5)
    w1 = jax.random.uniform(k_w1, (dim, inner), jnp.float32, -lim1, lim1)
    b1 = jax.random.uniform(k_b1, (inner,), jnp.float32, -lim1, lim1)
    w2 = jax.random.uniform(k_w2, (inner, dim_out), jnp.float32, -lim2, lim2)
    b2 = jax.random.uniform(k_b2, (dim_out,), jnp.float32, -lim2, lim2)

    out = feedforward(x, w1, b1, w2, b2)
    out = jax.block_until_ready(out)

    ref = feedforward_reference(x, w1, b1, w2, b2)
    assert out.shape == (batch, seq, dim_out)
    err = jnp.max(jnp.abs(out.astype(jnp.float32) - ref.astype(jnp.float32)))
    assert jnp.allclose(out, ref, atol=1e-4, rtol=1e-4), f"max abs err {err}"

    print("KERNEL_OK")
</pallas_src>

<mosaic_0001>
module attributes {stable_mosaic.version = 11 : i64} {
  func.func @_ffn_kernel_f32(%arg0: i32, %arg1: i32, %arg2: memref<16x32xf32, #tpu.memory_space<vmem>>, %arg3: memref<32x128xf32, #tpu.memory_space<vmem>>, %arg4: memref<1x128xf32, #tpu.memory_space<vmem>>, %arg5: memref<128x32xf32, #tpu.memory_space<vmem>>, %arg6: memref<1x32xf32, #tpu.memory_space<vmem>>, %arg7: memref<16x32xf32, #tpu.memory_space<vmem>>) attributes {dimension_semantics = [#tpu.dimension_semantics<parallel>, #tpu.dimension_semantics<arbitrary>], iteration_bounds = array<i64: 1, 1>, scalar_prefetch = 0 : i64, scratch_operands = 0 : i64, tpu.core_type = #tpu.core_type<tc>, window_params = [{transform_indices = @transform_0, window_bounds = array<i64: 16, 32>}, {transform_indices = @transform_1, window_bounds = array<i64: 32, 128>}, {transform_indices = @transform_2, window_bounds = array<i64: 1, 128>}, {transform_indices = @transform_3, window_bounds = array<i64: 128, 32>}, {pipeline_mode = #tpu.pipeline_mode<synchronous>, transform_indices = @transform_4, window_bounds = array<i64: 1, 32>}, {transform_indices = @transform_5, window_bounds = array<i64: 16, 32>}]} {
    %c0_i32 = arith.constant 0 : i32
    %0 = arith.cmpi eq, %arg1, %c0_i32 : i32
    %1 = arith.extui %0 : i1 to i32
    %c0_i32_0 = arith.constant 0 : i32
    %2 = arith.cmpi ne, %1, %c0_i32_0 : i32
    scf.if %2 {
      %c0_27 = arith.constant 0 : index
      %c0_28 = arith.constant 0 : index
      %53 = vector.load %arg6[%c0_27, %c0_28] : memref<1x32xf32, #tpu.memory_space<vmem>>, vector<1x32xf32>
      %54 = vector.shape_cast %53 : vector<1x32xf32> to vector<1x32xf32>
      %55 = vector.broadcast %54 : vector<1x32xf32> to vector<16x32xf32>
      %c0_29 = arith.constant 0 : index
      %c0_30 = arith.constant 0 : index
      %56 = vector.load %arg7[%c0_29, %c0_30] : memref<16x32xf32, #tpu.memory_space<vmem>>, vector<16x32xf32>
      tpu.vector_store %arg7[%c0_29, %c0_30], %55 {strides = array<i32>} : memref<16x32xf32, #tpu.memory_space<vmem>>, vector<16x32xf32>,
    } else {
    }
    %c0 = arith.constant 0 : index
    %c0_1 = arith.constant 0 : index
    %3 = vector.load %arg2[%c0, %c0_1] : memref<16x32xf32, #tpu.memory_space<vmem>>, vector<16x32xf32>
    %c0_2 = arith.constant 0 : index
    %c0_3 = arith.constant 0 : index
    %4 = vector.load %arg3[%c0_2, %c0_3] : memref<32x128xf32, #tpu.memory_space<vmem>>, vector<32x128xf32>
    %cst = arith.constant dense<0.000000e+00> : vector<16x128xf32>
    %5 = tpu.matmul %3, %4, %cst {dimension_numbers = #tpu.dot_dimension_numbers<[1], [0], [0], [1], [0, 0, 1, 1], [], []>} : vector<16x32xf32>, vector<32x128xf32>, vector<16x128xf32> -> vector<16x128xf32>
    %c0_4 = arith.constant 0 : index
    %c0_5 = arith.constant 0 : index
    %6 = vector.load %arg4[%c0_4, %c0_5] : memref<1x128xf32, #tpu.memory_space<vmem>>, vector<1x128xf32>
    %7 = vector.broadcast %6 : vector<1x128xf32> to vector<16x128xf32>
    %8 = arith.addf %5, %7 : vector<16x128xf32>
    %cst_6 = arith.constant 5.000000e-01 : f32
    %9 = vector.broadcast %cst_6 : f32 to vector<16x128xf32>
    %10 = arith.mulf %9, %8 : vector<16x128xf32>
    %cst_7 = arith.constant 0.707106769 : f32
    %11 = vector.broadcast %cst_7 : f32 to vector<16x128xf32>
    %12 = arith.mulf %8, %11 : vector<16x128xf32>
    %13 = math.absf %12 : vector<16x128xf32>
    %cst_8 = arith.constant 0.327591091 : f32
    %14 = vector.broadcast %cst_8 : f32 to vector<16x128xf32>
    %15 = arith.mulf %14, %13 : vector<16x128xf32>
    %cst_9 = arith.constant 1.000000e+00 : f32
    %16 = vector.broadcast %cst_9 : f32 to vector<16x128xf32>
    %17 = arith.addf %16, %15 : vector<16x128xf32>
    %18 = tpu.reciprocal %17 : vector<16x128xf32> -> vector<16x128xf32>
    %cst_10 = arith.constant 1.06140542 : f32
    %19 = vector.broadcast %cst_10 : f32 to vector<16x128xf32>
    %20 = arith.mulf %19, %18 : vector<16x128xf32>
    %cst_11 = arith.constant -1.45315206 : f32
    %21 = vector.broadcast %cst_11 : f32 to vector<16x128xf32>
    %22 = arith.addf %20, %21 : vector<16x128xf32>
    %23 = arith.mulf %22, %18 : vector<16x128xf32>
    %cst_12 = arith.constant 1.42141378 : f32
    %24 = vector.broadcast %cst_12 : f32 to vector<16x128xf32>
    %25 = arith.addf %23, %24 : vector<16x128xf32>
    %26 = arith.mulf %25, %18 : vector<16x128xf32>
    %cst_13 = arith.constant -0.284496725 : f32
    %27 = vector.broadcast %cst_13 : f32 to vector<16x128xf32>
    %28 = arith.addf %26, %27 : vector<16x128xf32>
    %29 = arith.mulf %28, %18 : vector<16x128xf32>
    %cst_14 = arith.constant 0.254829586 : f32
    %30 = vector.broadcast %cst_14 : f32 to vector<16x128xf32>
    %31 = arith.addf %29, %30 : vector<16x128xf32>
    %32 = arith.mulf %31, %18 : vector<16x128xf32>
    %cst_15 = arith.constant 0.000000e+00 : f32
    %33 = vector.broadcast %cst_15 : f32 to vector<16x128xf32>
    %34 = arith.subf %33, %13 : vector<16x128xf32>
    %35 = arith.mulf %34, %13 : vector<16x128xf32>
    %36 = math.exp %35 : vector<16x128xf32>
    %37 = arith.mulf %32, %36 : vector<16x128xf32>
    %cst_16 = arith.constant 1.000000e+00 : f32
    %38 = vector.broadcast %cst_16 : f32 to vector<16x128xf32>
    %39 = arith.subf %38, %37 : vector<16x128xf32>
    %cst_17 = arith.constant 0.000000e+00 : f32
    %40 = vector.broadcast %cst_17 : f32 to vector<16x128xf32>
    %41 = arith.cmpf olt, %12, %40 : vector<16x128xf32>
    %cst_18 = arith.constant 0.000000e+00 : f32
    %42 = vector.broadcast %cst_18 : f32 to vector<16x128xf32>
    %43 = arith.subf %42, %39 : vector<16x128xf32>
    %44 = arith.select %41, %43, %39 : vector<16x128xi1>, vector<16x128xf32>
    %cst_19 = arith.constant 1.000000e+00 : f32
    %45 = vector.broadcast %cst_19 : f32 to vector<16x128xf32>
    %46 = arith.addf %45, %44 : vector<16x128xf32>
    %47 = arith.mulf %10, %46 : vector<16x128xf32>
    %c0_20 = arith.constant 0 : index
    %c0_21 = arith.constant 0 : index
    %48 = vector.load %arg7[%c0_20, %c0_21] : memref<16x32xf32, #tpu.memory_space<vmem>>, vector<16x32xf32>
    %c0_22 = arith.constant 0 : index
    %c0_23 = arith.constant 0 : index
    %49 = vector.load %arg5[%c0_22, %c0_23] : memref<128x32xf32, #tpu.memory_space<vmem>>, vector<128x32xf32>
    %cst_24 = arith.constant dense<0.000000e+00> : vector<16x32xf32>
    %50 = tpu.matmul %47, %49, %cst_24 {dimension_numbers = #tpu.dot_dimension_numbers<[1], [0], [0], [1], [0, 0, 1, 1], [], []>} : vector<16x128xf32>, vector<128x32xf32>, vector<16x32xf32> -> vector<16x32xf32>
    %51 = arith.addf %48, %50 : vector<16x32xf32>
    %c0_25 = arith.constant 0 : index
    %c0_26 = arith.constant 0 : index
    %52 = vector.load %arg7[%c0_25, %c0_26] : memref<16x32xf32, #tpu.memory_space<vmem>>, vector<16x32xf32>
    tpu.vector_store %arg7[%c0_25, %c0_26], %51 {strides = array<i32>} : memref<16x32xf32, #tpu.memory_space<vmem>>, vector<16x32xf32>,
    return
  }
  func.func @transform_0(%arg0: i32, %arg1: i32) -> (i32, i32) {
    %c0_i32 = arith.constant 0 : i32
    %c0_i32_0 = arith.constant 0 : i32
    return %arg0, %c0_i32 : i32, i32
  }
  func.func @transform_1(%arg0: i32, %arg1: i32) -> (i32, i32) {
    %c0_i32 = arith.constant 0 : i32
    %c0_i32_0 = arith.constant 0 : i32
    return %c0_i32, %arg1 : i32, i32
  }
  func.func @transform_2(%arg0: i32, %arg1: i32) -> (i32, i32) {
    %c0_i32 = arith.constant 0 : i32
    %c0_i32_0 = arith.constant 0 : i32
    return %c0_i32, %arg1 : i32, i32
  }
  func.func @transform_3(%arg0: i32, %arg1: i32) -> (i32, i32) {
    %c0_i32 = arith.constant 0 : i32
    %c0_i32_0 = arith.constant 0 : i32
    return %arg1, %c0_i32 : i32, i32
  }
  func.func @transform_4(%arg0: i32, %arg1: i32) -> (i32, i32) {
    %c0_i32 = arith.constant 0 : i32
    %c0_i32_0 = arith.constant 0 : i32
    %c0_i32_1 = arith.constant 0 : i32
    return %c0_i32, %c0_i32_0 : i32, i32
  }
  func.func @transform_5(%arg0: i32, %arg1: i32) -> (i32, i32) {
    %c0_i32 = arith.constant 0 : i32
    %c0_i32_0 = arith.constant 0 : i32
    return %arg0, %c0_i32 : i32, i32
  }
}

</mosaic_0001>

<llo_original>
// kernel: tpu_custom_call.1
$region0: #{tpu_custom_call.1}
  #allocation0 [shape = 'u32[]', space=smem, size = 0x4, offset = 0x4, fixed_abs, tag = 'smem constant byte address 0x4 - core index']
  #allocation1 [shape = 'u32[72,128]{1,0:T(1,128)}', space=vmem, size = 0x9000, scoped, tag = 'internal scratch']
  %s0 = inlined_call_operand.vmem [shape: f32[16,32], index: 0, kind: input, shape index: {}]
  %s1 = inlined_call_operand.vmem [shape: f32[32,128], index: 1, kind: input, shape index: {}]
  %s2 = inlined_call_operand.vmem [shape: f32[1,128], index: 2, kind: input, shape index: {}]
  %s3 = inlined_call_operand.vmem [shape: f32[128,32], index: 3, kind: input, shape index: {}]
  %s4 = inlined_call_operand.vmem [shape: f32[1,32], index: 4, kind: input, shape index: {}]
  %s5 = inlined_call_operand.hbm [shape: f32[16,32], index: 5, kind: output, shape index: {}]
  %s6 = sld [smem:[#allocation0]]
  $region34: #{tpu_custom_call.1} parent=0
    _
  %s8 = ssub.s32 1, %s6
  %s9 = scalar_select 0, %s8, %s6
  $region1: #{tpu_custom_call.1} parent=0
    #allocation2 [shape = 'u8[8192]{0}', space=vmem, size = 0x2000, scoped, tag = 'output window, operand 0, single buffered']
    #allocation3 [shape = 's32[1]{0}', space=sflag, size = 0x4, scoped, tag = 'scoped memory for tpu_custom_call.1']
    %10 = vsyncpa [#allocation3], 0
    // Predicated region
    $region2: #{tpu_custom_call.1} parent=1 // pred_check
      _
    $region3: #{tpu_custom_call.1} parent=1 // pred_check_branch
      %12 = sbr.rel (0) target = $region5
    $region4: #{tpu_custom_call.1} parent=1 // pred_region
      _
    $region5: #{tpu_custom_call.1} parent=1 // pred_fallthru
      _
    // Predicated region
    $region6: #{tpu_custom_call.1} parent=1 // pred_check
      _
    $region7: #{tpu_custom_call.1} parent=1 // pred_check_branch
      %14 = sbr.rel (0) target = $region9
    $region8: #{tpu_custom_call.1} parent=1 // pred_region
      _
    $region9: #{tpu_custom_call.1} parent=1 // pred_fallthru
      _
    // Predicated region
    $region10: #{tpu_custom_call.1} parent=1 // pred_check
      _
    $region11: #{tpu_custom_call.1} parent=1 // pred_check_branch
      %16 = sbr.rel (0) target = $region13
    $region12: #{tpu_custom_call.1} parent=1 // pred_region
      _
    $region13: #{tpu_custom_call.1} parent=1 // pred_fallthru
      _
    // Predicated region
    $region14: #{tpu_custom_call.1} parent=1 // pred_check
      _
    $region15: #{tpu_custom_call.1} parent=1 // pred_check_branch
      %18 = sbr.rel (0) target = $region17
    $region16: #{tpu_custom_call.1} parent=1 // pred_region
      _
    $region17: #{tpu_custom_call.1} parent=1 // pred_fallthru
      _
    // Predicated region
    $region18: #{tpu_custom_call.1} parent=1 // pred_check
      _
    $region19: #{tpu_custom_call.1} parent=1 // pred_check_branch
      %20 = sbr.rel (0) target = $region21
    $region20: #{tpu_custom_call.1} parent=1 // pred_region
      _
    $region21: #{tpu_custom_call.1} parent=1 // pred_fallthru
      _
    %p21 = scmp.eq.s32.totalorder 0, 0
    // Predicated region
    $region22: #{tpu_custom_call.1} parent=1 // pred_check
      %p22 = pneg %p21
    $region23: #{tpu_custom_call.1} parent=1 // pred_check_branch
      %24 = sbr.rel (%p22) target = $region25
    $region24: #{tpu_custom_call.1} parent=1 // pred_region
      %v25 = vld [vmem:[%s4] sm:$0x1]
      %v27 = vperm.slane %v25, 0
      %vm29 = vcmask 261120
      %30 = vst.msk [vmem:[#allocation2] sm:$0xff] %vm29, %v27
      %31 = vst.msk [vmem:[#allocation2 + $0x8] sm:$0xff] %vm29, %v27
    $region25: #{tpu_custom_call.1} parent=1 // pred_fallthru
      _
    %v32 = vld [vmem:[%s0] sm:$0xff]
    %v33 = vld [vmem:[%s0 + $0x8] sm:$0xff]
    %v34 = vld [vmem:[%s1] sm:$0xff]
    %v35 = vld [vmem:[%s1 + $0x8] sm:$0xff]
    %v36 = vld [vmem:[%s1 + $0x10] sm:$0xff]
    %v37 = vld [vmem:[%s1 + $0x18] sm:$0xff]
    %v38 = vld [vmem:[%s2] sm:$0x1]
    %v40 = vperm.slane %v38, 0
    %vm42 = vcmask 261120
    %v44 = vsel %vm42, %v32, 0
    %v47 = vsel %vm42, %v33, 0
    %49 = vmatpush.msra.mxu0 0.0
    %50 = vmatpush.msra.mxu0 0.0
    %51 = vmatpush.msra.mxu0 0.0
    %52 = vmatpush.msra.mxu0 0.0
    %53 = vmatpush.msra.mxu0 0.0
    %54 = vmatpush.msra.mxu0 0.0
    %55 = vmatpush.msra.mxu0 0.0
    %56 = vmatpush.msra.mxu0 0.0
    %57 = vmatpush.msra.mxu0 0.0
    %58 = vmatpush.msra.mxu0 0.0
    %59 = vmatpush.msra.mxu0 0.0
    %60 = vmatpush.msra.mxu0 0.0
    %61 = vmatpush.msra.mxu0 %v37
    %62 = vmatpush.msra.mxu0 %v36
    %63 = vmatpush.msra.mxu0 %v35
    %64 = vmatpush.msra.mxu0 %v34
    %65 = vmatmul.f32.gmra.mxu0 %v44
    %v66 = vpop.f32.mrf.mxu0
    %v67 = vadd.f32 %v40, %v66
    %68 = vmatmul.f32.gmra.mxu0 %v47
    %v69 = vpop.f32.mrf.mxu0
    %v70 = vadd.f32 %v40, %v69
    %71 = vdwg.mxu0
    %v72 = vmul.f32 %v67, 0.5
    %v73 = vmul.f32 %v70, 0.5
    %v74 = vmul.f32 %v67, 0.70710677
    %v75 = vmul.f32 %v70, 0.70710677
    %v76 = vand.u32 2147483647, %v74
    %v77 = vand.u32 2147483647, %v75
    %v78 = vmul.f32 %v76, 0.3275911
    %v79 = vmul.f32 %v77, 0.3275911
    %v80 = vadd.f32 %v78, 1.0
    %v81 = vadd.f32 %v79, 1.0
    %v82 = vrcp.pop %v80
    %v83 = vmul.f32 %v80, %v82
    %v84 = vsub.f32 1.0, %v83
    %v85 = vmul.f32 %v82, %v84
    %v86 = vadd.f32 %v82, %v85
    %vm87 = vweird.f32 %v80
    %vm88 = vweird.f32 %v82
    %vm89 = vmor %vm87, %vm88
    %v90 = vsel %vm89, %v82, %v86
    %v91 = vand.u32 2147483647, %v80
    %vm92 = vcmp.eq.f32.partialorder %v91, 8.507059e+37
    %v93 = vand.u32 %v80, 2147483648
    %v94 = vor.u32 1.1754944e-38, %v93
    %v95 = vsel %vm92, %v94, %v90
    %v96 = vrcp.pop %v81
    %v97 = vmul.f32 %v81, %v96
    %v98 = vsub.f32 1.0, %v97
    %v99 = vmul.f32 %v96, %v98
    %v100 = vadd.f32 %v96, %v99
    %vm101 = vweird.f32 %v81
    %vm102 = vweird.f32 %v96
    %vm103 = vmor %vm101, %vm102
    %v104 = vsel %vm103, %v96, %v100
    %v105 = vand.u32 2147483647, %v81
    %vm106 = vcmp.eq.f32.partialorder %v105, 8.507059e+37
    %v107 = vand.u32 %v81, 2147483648
    %v108 = vor.u32 1.1754944e-38, %v107
    %v109 = vsel %vm106, %v108, %v104
    %v110 = vmul.f32 %v95, 1.0614054
    %v111 = vmul.f32 %v109, 1.0614054
    %v112 = vadd.f32 %v110, -1.4531521
    %v113 = vadd.f32 %v111, -1.4531521
    %v114 = vmul.f32 %v112, %v95
    %v115 = vmul.f32 %v113, %v109
    %v116 = vadd.f32 %v114, 1.4214138
    %v117 = vadd.f32 %v115, 1.4214138
    %v118 = vmul.f32 %v116, %v95
    %v119 = vmul.f32 %v117, %v109
    %v120 = vadd.f32 %v118, -0.28449672
    %v121 = vadd.f32 %v119, -0.28449672
    %v122 = vmul.f32 %v120, %v95
    %v123 = vmul.f32 %v121, %v109
    %v124 = vadd.f32 %v122, 0.2548296
    %v125 = vadd.f32 %v123, 0.2548296
    %v126 = vmul.f32 %v124, %v95
    %v127 = vmul.f32 %v125, %v109
    %v128 = vsub.f32 0.0, %v76
    %v129 = vsub.f32 0.0, %v77
    %v130 = vmul.f32 %v128, %v76
    %v131 = vmul.f32 %v129, %v77
    %v132 = vmul.f32 %v130, 1.442695
    %v133 = vpow.pop %v132
    %v134 = vmul.f32 %v131, 1.442695
    %v135 = vpow.pop %v134
    %v136 = vmul.f32 %v126, %v133
    %v137 = vmul.f32 %v127, %v135
    %v138 = vsub.f32 1.0, %v136
    %v139 = vsub.f32 1.0, %v137
    %vm140 = vcmp.lt.f32.partialorder %v74, 0.0
    %vm141 = vcmp.lt.f32.partialorder %v75, 0.0
    %v142 = vsub.f32 0.0, %v138
    %v143 = vsub.f32 0.0, %v139
    %v144 = vsel %vm140, %v142, %v138
    %v145 = vsel %vm141, %v143, %v139
    %v146 = vadd.f32 %v144, 1.0
    %v147 = vadd.f32 %v145, 1.0
    %v148 = vmul.f32 %v72, %v146
    %v149 = vmul.f32 %v73, %v147
    %v150 = vld [vmem:[#allocation2] sm:$0xff]
    %v151 = vld [vmem:[#allocation2 + $0x8] sm:$0xff]
    %v152 = vld [vmem:[%s3] sm:$0xff]
    %v153 = vld [vmem:[%s3 + $0x8] sm:$0xff]
    %v154 = vld [vmem:[%s3 + $0x10] sm:$0xff]
    %v155 = vld [vmem:[%s3 + $0x18] sm:$0xff]
    %v156 = vld [vmem:[%s3 + $0x20] sm:$0xff]
    %v157 = vld [vmem:[%s3 + $0x28] sm:$0xff]
    %v158 = vld [vmem:[%s3 + $0x30] sm:$0xff]
    %v159 = vld [vmem:[%s3 + $0x38] sm:$0xff]
    %v160 = vld [vmem:[%s3 + $0x40] sm:$0xff]
    %v161 = vld [vmem:[%s3 + $0x48] sm:$0xff]
    %v162 = vld [vmem:[%s3 + $0x50] sm:$0xff]
    %v163 = vld [vmem:[%s3 + $0x58] sm:$0xff]
    %v164 = vld [vmem:[%s3 + $0x60] sm:$0xff]
    %v165 = vld [vmem:[%s3 + $0x68] sm:$0xff]
    %v166 = vld [vmem:[%s3 + $0x70] sm:$0xff]
    %v167 = vld [vmem:[%s3 + $0x78] sm:$0xff]
    %168 = vmatpush.msra.mxu0 %v167
    %169 = vmatpush.msra.mxu0 %v166
    %170 = vmatpush.msra.mxu0 %v165
    %171 = vmatpush.msra.mxu0 %v164
    %172 = vmatpush.msra.mxu0 %v163
    %173 = vmatpush.msra.mxu0 %v162
    %174 = vmatpush.msra.mxu0 %v161
    %175 = vmatpush.msra.mxu0 %v160
    %176 = vmatpush.msra.mxu0 %v159
    %177 = vmatpush.msra.mxu0 %v158
    %178 = vmatpush.msra.mxu0 %v157
    %179 = vmatpush.msra.mxu0 %v156
    %180 = vmatpush.msra.mxu0 %v155
    %181 = vmatpush.msra.mxu0 %v154
    %182 = vmatpush.msra.mxu0 %v153
    %183 = vmatpush.msra.mxu0 %v152
    %184 = vmatmul.f32.gmra.mxu0 %v148
    %v185 = vpop.f32.mrf.mxu0
    %v186 = vadd.f32 0.0, %v185
    %187 = vmatmul.f32.gmra.mxu0 %v149
    %v188 = vpop.f32.mrf.mxu0
    %v189 = vadd.f32 0.0, %v188
    %190 = vdwg.mxu0
    %v191 = vadd.f32 %v150, %v186
    %v192 = vadd.f32 %v151, %v189
    %193 = vst.msk [vmem:[#allocation2] sm:$0xff] %vm42, %v191
    %194 = vst.msk [vmem:[#allocation2 + $0x8] sm:$0xff] %vm42, %v192
    // Predicated region
    $region26: #{tpu_custom_call.1} parent=1 // pred_check
      _
    $region27: #{tpu_custom_call.1} parent=1 // pred_check_branch
      %196 = sbr.rel (0) target = $region29
    $region28: #{tpu_custom_call.1} parent=1 // pred_region
      %198 = vsyncadd [#allocation3], 0
      %s199 = sshll.u32 [#allocation2], 4
      %s200 = int_to_ptr.vmem [resolvable:$true] %s199
      %s201 = sshll.u32 %s5, 4
      %s202 = int_to_ptr.hbm [resolvable:$true] %s201
      %207 = dma.vmem_to_hbm [thread:$0]  %s200, 256, %s202, [#allocation3], 128, 128, 8
    $region29: #{tpu_custom_call.1} parent=1 // pred_fallthru
      _
    // Predicated region
    $region30: #{tpu_custom_call.1} parent=1 // pred_check
      _
    $region31: #{tpu_custom_call.1} parent=1 // pred_check_branch
      %209 = sbr.rel (0) target = $region33
    $region32: #{tpu_custom_call.1} parent=1 // pred_region
      %211 = dma.done [#allocation3], 256
    $region33: #{tpu_custom_call.1} parent=1 // pred_fallthru
      _
    %212 = vsyncpa [#allocation3], 1

</llo_original>
